<compile_context>
chip_gen: v7x
topology: tpu7x:2x2x1
jax: 0.10.0
libtpu: 0.0.40
codegen_flags: <defaults>
</compile_context>

<pallas_src>
import functools

import jax
import jax.numpy as jnp
from jax.experimental import pallas as pl
from jax.experimental.pallas import tpu as pltpu


_LANE = 128
_MAX_COLS = 1024                  # lane-dense last dim (multiple of 128)
_MAX_TILE_ROWS = 1024             # 1024 x 1024 f32 block = 4 MiB
_MIN_PALLAS_ELEMS = 256 * 1024    # below ~1 MiB f32, fused XLA is already optimal
_VMEM_LIMIT = 32 * 1024 * 1024    # 2 operands x 2 buffers x 4 MiB = 16 MiB << limit


def _row_axis_semantics():
    """CORE_PARALLEL on v7x (2 TensorCores/chip); plain 'parallel' elsewhere."""
    try:
        kind = jax.devices()[0].device_kind.lower()
    except Exception:
        return "parallel"
    if "v7" in kind:
        return pltpu.CORE_PARALLEL
    return "parallel"


def _make_neg_scale_kernel(neg_alpha):
    def kernel(g_ref, o_ref):
        # Multiply in f32 (v5e's VPU has no bf16), cast back on store.
        o_ref[...] = (g_ref[...].astype(jnp.float32) * neg_alpha).astype(o_ref.dtype)
    return kernel


def _neg_scale(g, alpha):
    """grad_in = (-alpha) * grad_out; Pallas-tiled for large lane-aligned slabs."""
    neg_alpha = -float(alpha)
    n = g.size

    # Small or lane-unaligned cotangents: fused XLA multiply is already at HBM
    # roofline; skip the pallas_call fixed cost (and any reshape plumbing).
    if n < _MIN_PALLAS_ELEMS or n % _LANE != 0:
        return (g * jnp.asarray(neg_alpha, dtype=g.dtype)).astype(g.dtype)

    orig_shape, orig_dtype = g.shape, g.dtype
    itemsize = jnp.dtype(orig_dtype).itemsize

    # Largest lane-dense width (multiple of 128, up to 1024) dividing n exactly.
    cols = _LANE
    for c in (_MAX_COLS, 512, 256, _LANE):
        if n % c == 0:
            cols = c
            break
    rows = n // cols
    g2d = g.reshape(rows, cols)            # contiguous reshape: no copy, no pad

    # Row-block size: as big as possible (amortizes ~0.35 us/step), but keep
    # >=2 blocks for multi-MiB slabs so the grid can shard across TensorCores.
    if rows > _MAX_TILE_ROWS:
        tile_rows = _MAX_TILE_ROWS
    elif rows * cols * itemsize > (2 << 20) and rows > 16:
        tile_rows = (((rows + 1) // 2) + 15) // 16 * 16   # ~half, 16-aligned
    else:
        tile_rows = rows                    # full row extent: always legal

    grid = (pl.cdiv(rows, tile_rows),)      # ragged last block handled by Pallas
                                            # (OOB writes dropped; elementwise-safe)

    out2d = pl.pallas_call(
        _make_neg_scale_kernel(neg_alpha),
        out_shape=jax.ShapeDtypeStruct((rows, cols), orig_dtype),
        grid=grid,
        in_specs=[pl.BlockSpec((tile_rows, cols), lambda i: (i, 0))],
        out_specs=pl.BlockSpec((tile_rows, cols), lambda i: (i, 0)),
        compiler_params=pltpu.CompilerParams(
            dimension_semantics=(_row_axis_semantics(),),
            vmem_limit_bytes=_VMEM_LIMIT,
        ),
        cost_estimate=pl.CostEstimate(
            flops=n, transcendentals=0, bytes_accessed=2 * n * itemsize),
    )(g2d)

    return out2d.reshape(orig_shape)


# ---------------------------------------------------------------------------
# RevGrad module equivalent (custom VJP; alpha is static / non-differentiable)
# ---------------------------------------------------------------------------
@functools.partial(jax.custom_vjp, nondiff_argnums=(1,))
def revgrad(x, alpha=1.0):
    # Forward of RevGrad is a pure identity (no kernel launch, no HBM traffic).
    return x


def _revgrad_fwd(x, alpha):
    return x, None


def _revgrad_bwd(alpha, _residuals, g):
    return (_neg_scale(g, alpha),)


revgrad.defvjp(_revgrad_fwd, _revgrad_bwd)


class RevGrad:
    """JAX/Pallas equivalent of the PyTorch RevGrad module (no parameters)."""

    def __init__(self, alpha=1.0, *args, **kwargs):
        self._alpha = float(alpha)

    def __call__(self, x):
        return revgrad(x, self._alpha)


# ---------------------------------------------------------------------------
# Demo / smoke test
# ---------------------------------------------------------------------------
if __name__ == "__main__":
    key = jax.random.PRNGKey(0)
    k_small, k_big, k_w = jax.random.split(key, 3)

    # Small demo shape implied by typical module usage (NCHW: batch=2, ch=4, 16x16).
    x = jax.random.normal(k_small, (2, 4, 16, 16), dtype=jnp.float32)
    layer = RevGrad(alpha=1.0)

    # Forward: identity (no kernel launch).
    y = jax.block_until_ready(layer(x))
    assert y.shape == x.shape and y.dtype == x.dtype
    assert jnp.allclose(y, x), "forward is not identity"

    # Backward (small -> fused-XLA fallback path): gradient is reversed.
    g = jax.block_until_ready(jax.grad(lambda v: jnp.sum(layer(v) * 2.0))(x))
    assert jnp.allclose(g, -2.0 * jnp.ones_like(x)), "backward does not reverse gradient"

    # Backward via the Pallas kernel (above the small-size fallback threshold):
    # batch=2, seq=300, hidden=1024 -> 2.34 MiB slab -> 2 row-blocks, partial last.
    layer2 = RevGrad(alpha=0.5)
    x2 = jax.random.normal(k_big, (2, 300, 1024), dtype=jnp.float32)
    w = jax.random.normal(k_w, (2, 300, 1024), dtype=jnp.float32)
    g2 = jax.block_until_ready(jax.grad(lambda v: jnp.sum(layer2(v) * w))(x2))
    assert g2.shape == x2.shape and g2.dtype == x2.dtype
    assert jnp.allclose(g2, -0.5 * w, rtol=1e-6, atol=1e-6), "pallas backward mismatch"

    print("KERNEL_OK")
</pallas_src>

<mosaic_0001>
module attributes {stable_mosaic.version = 11 : i64} {
  func.func @kernel(%arg0: i32, %arg1: memref<304x1024xf32, #tpu.memory_space<vmem>>, %arg2: memref<304x1024xf32, #tpu.memory_space<vmem>>) attributes {dimension_semantics = [#tpu.dimension_semantics<parallel>], iteration_bounds = array<i64: 2>, scalar_prefetch = 0 : i64, scratch_operands = 0 : i64, tpu.core_type = #tpu.core_type<tc>, window_params = [{transform_indices = @transform_0, window_bounds = array<i64: 304, 1024>}, {transform_indices = @transform_1, window_bounds = array<i64: 304, 1024>}]} {
    %c0 = arith.constant 0 : index
    %c0_0 = arith.constant 0 : index
    %0 = vector.load %arg1[%c0, %c0_0] : memref<304x1024xf32, #tpu.memory_space<vmem>>, vector<304x1024xf32>
    %cst = arith.constant -5.000000e-01 : f32
    %1 = vector.broadcast %cst : f32 to vector<304x1024xf32>
    %2 = arith.mulf %0, %1 : vector<304x1024xf32>
    %c0_1 = arith.constant 0 : index
    %c0_2 = arith.constant 0 : index
    %3 = vector.load %arg2[%c0_1, %c0_2] : memref<304x1024xf32, #tpu.memory_space<vmem>>, vector<304x1024xf32>
    tpu.vector_store %arg2[%c0_1, %c0_2], %2 {strides = array<i32>} : memref<304x1024xf32, #tpu.memory_space<vmem>>, vector<304x1024xf32>,
    return
  }
  func.func @transform_0(%arg0: i32) -> (i32, i32) {
    %c0_i32 = arith.constant 0 : i32
    %c0_i32_0 = arith.constant 0 : i32
    return %arg0, %c0_i32 : i32, i32
  }
  func.func @transform_1(%arg0: i32) -> (i32, i32) {
    %c0_i32 = arith.constant 0 : i32
    %c0_i32_0 = arith.constant 0 : i32
    return %arg0, %c0_i32 : i32, i32
  }
}

</mosaic_0001>

<llo_original>
// kernel: tpu_custom_call.1
$region0: #{tpu_custom_call.1}
  #allocation0 [shape = 'u32[]', space=smem, size = 0x4, offset = 0x4, fixed_abs, tag = 'smem constant byte address 0x4 - core index']
  #allocation1 [shape = 'u32[144,128]{1,0:T(1,128)}', space=vmem, size = 0x12000, scoped, tag = 'internal scratch']
  %s0 = inlined_call_operand.hbm [shape: f32[600,1024], index: 0, kind: input, shape index: {}]
  %s1 = inlined_call_operand.hbm [shape: f32[600,1024], index: 1, kind: output, shape index: {}]
  %s2 = sld [smem:[#allocation0]]
  $region41: #{tpu_custom_call.1} parent=0
    _
  %s4 = ssub.s32 1, %s2
  %s5 = scalar_select 0, %s4, %s2
  $region1: #{tpu_custom_call.1} parent=0
    #allocation2 [shape = 'u8[2490368]{0}', space=vmem, size = 0x260000, scoped, tag = 'input window, operand 0']
    #allocation3 [shape = 's32[2]{0}', space=sflag, size = 0x8, scoped, tag = 'scoped memory for tpu_custom_call.1']
    #allocation4 [shape = 's32[2]{0}', space=sflag, size = 0x8, scoped, tag = 'scoped memory for tpu_custom_call.1']
    #allocation5 [shape = 'u8[2490368]{0}', space=vmem, size = 0x260000, scoped, tag = 'output window, operand 0']
    %6 = vsyncpa [#allocation3], 0
    %s7 = scalar_lea.sflag [#allocation3], 1
    %8 = vsyncpa %s7, 0
    %9 = vsyncpa [#allocation4], 0
    %s10 = scalar_lea.sflag [#allocation4], 1
    %11 = vsyncpa %s10, 0
    loop: start=0, step=1, limit=4
    $region2: #{tpu_custom_call.1} parent=1 // loop_pre_header
      _
    $region3: #{tpu_custom_call.1} parent=1 // loop_header
      %s13 = sphi 0, %s17
      %p14 = scmp.ge.s32.totalorder %s13, 4
      %s23 = sphi 0, %s25
      %s26 = sphi 0, %s23
      %s27 = sphi 0, %s26
      %s43 = sphi 0, %s27
      %s49 = sphi 0, %s51
      %s52 = sphi 0, %s49
      %s53 = sphi 0, %s52
      %s69 = sphi 0, %s53
    $region4: #{tpu_custom_call.1} parent=1 // loop_header_branch
      %16 = sbr.rel (%p14) target = $region8
    $region5: #{tpu_custom_call.1} parent=1 // loop_body
      %s18 = ssub.s32 %s13, 1
      %s19 = ssub.s32 %s13, 2
      %s20 = sadd.s32 %s13, 1
      %s21 = ssub.s32 %s13, %s20
      %p22 = scmp.eq.s32.totalorder %s21, 0
      %s24 = sadd.s32 %s23, 1
      %s25 = scalar_select %p22, %s23, %s24
      %p28 = pneg %p22
      %p29 = scmp.eq.s32.totalorder %s13, 1
      %p30 = por %p28, %p29
      %p31 = scmp.ne.s32.totalorder %s23, %s26
      %p32 = scmp.eq.s32.totalorder %s13, 0
      %p33 = por %p31, %p32
      %p34 = scmp.ne.s32.totalorder %s23, %s26
      %p35 = scmp.eq.s32.totalorder %s18, 1
      %p36 = por %p34, %p35
      %p37 = scmp.ne.s32.totalorder %s26, %s27
      %p38 = scmp.eq.s32.totalorder %s18, 0
      %p39 = por %p37, %p38
      %p40 = scmp.ne.s32.totalorder %s26, %s27
      %p41 = scmp.eq.s32.totalorder %s19, 1
      %p42 = por %p40, %p41
      %p44 = scmp.ne.s32.totalorder %s27, %s43
      %p45 = scmp.eq.s32.totalorder %s19, 0
      %p46 = por %p44, %p45
      %s47 = ssub.s32 %s13, %s20
      %p48 = scmp.eq.s32.totalorder %s47, 0
      %s50 = sadd.s32 %s49, 1
      %s51 = scalar_select %p48, %s49, %s50
      %p54 = pneg %p48
      %p55 = scmp.eq.s32.totalorder %s13, 1
      %p56 = por %p54, %p55
      %p57 = scmp.ne.s32.totalorder %s49, %s52
      %p58 = scmp.eq.s32.totalorder %s13, 0
      %p59 = por %p57, %p58
      %p60 = scmp.ne.s32.totalorder %s49, %s52
      %p61 = scmp.eq.s32.totalorder %s18, 1
      %p62 = por %p60, %p61
      %p63 = scmp.ne.s32.totalorder %s52, %s53
      %p64 = scmp.eq.s32.totalorder %s18, 0
      %p65 = por %p63, %p64
      %p66 = scmp.ne.s32.totalorder %s52, %s53
      %p67 = scmp.eq.s32.totalorder %s19, 1
      %p68 = por %p66, %p67
      %p70 = scmp.ne.s32.totalorder %s53, %s69
      %p71 = scmp.eq.s32.totalorder %s19, 0
      %p72 = por %p70, %p71
      %p73 = scmp.le.s32.totalorder 1, %s13
      %p74 = scmp.lt.s32.totalorder %s13, 3
      %p75 = pnand %p73, %p74
      %p76 = pneg %p75
      // Predicated region
      $region9: #{tpu_custom_call.1} parent=5 // pred_check
        _
      $region10: #{tpu_custom_call.1} parent=5 // pred_check_branch
        %78 = sbr.rel (%p75) target = $region12
      $region11: #{tpu_custom_call.1} parent=5 // pred_region
        %s79 = ssub.s32 %s13, 1
      $region12: #{tpu_custom_call.1} parent=5 // pred_fallthru
        _
      %p80 = scmp.lt.s32.totalorder %s13, 2
      // Predicated region
      $region13: #{tpu_custom_call.1} parent=5 // pred_check
        %p81 = pneg %p80
      $region14: #{tpu_custom_call.1} parent=5 // pred_check_branch
        %83 = sbr.rel (%p81) target = $region16
      $region15: #{tpu_custom_call.1} parent=5 // pred_region
        // Predicated region
        $region17: #{tpu_custom_call.1} parent=15 // pred_check
          %p84 = pneg %p33
        $region18: #{tpu_custom_call.1} parent=15 // pred_check_branch
          %86 = sbr.rel (%p84) target = $region20
        $region19: #{tpu_custom_call.1} parent=15 // pred_region
          %s87 = sand.u32 %s23, 1
          %s88 = scalar_lea.sflag [#allocation3], %s87
          %s89 = sand.u32 %s23, 1
          %s90 = smul.addr %s89, 2432
          %s91 = scalar_lea.vmem [#allocation2], %s90
          %s92 = smul.u32 38, %s13
          %s93 = ssub.s32 75, %s92
          %p94 = scmp.lt.s32.totalorder %s93, 38
          %s95 = scalar_select %p94, %s93, 38
          %s96 = smul.u32 128, %s95
          %s97 = smul.u32 %s96, 8
          %s99 = ssub.s32 38912, %s97
          %100 = vsyncadd %s88, %s99
          %p101 = scmp.ne.s32.totalorder 0, %s97
          %s102 = smul.addr %s92, 8
          %s103 = smul.addr %s102, 128
          %s104 = scalar_lea.hbm %s0, %s103
          %s105 = smul.u32 64, %s95
          %s106 = sshll.u32 %s91, 4
          %s107 = int_to_ptr.vmem [resolvable:$true] %s106
          %s108 = sshll.u32 %s105, 4
          %112 = dma.hbm_to_vmem [thread:$0]  (%p101), %s104, %s108, %s107, %s88, 1024, 1024, 64
        $region20: #{tpu_custom_call.1} parent=15 // pred_fallthru
          _
      $region16: #{tpu_custom_call.1} parent=5 // pred_fallthru
        _
      %p113 = scmp.le.s32.totalorder 1, %s13
      %p114 = scmp.lt.s32.totalorder %s13, 3
      %p115 = pnand %p113, %p114
      %p116 = pneg %p115
      // Predicated region
      $region21: #{tpu_custom_call.1} parent=5 // pred_check
        _
      $region22: #{tpu_custom_call.1} parent=5 // pred_check_branch
        %118 = sbr.rel (%p115) target = $region24
      $region23: #{tpu_custom_call.1} parent=5 // pred_region
        %s119 = ssub.s32 %s13, 1
        %s120 = sand.u32 %s26, 1
        %s121 = scalar_lea.sflag [#allocation3], %s120
        %s122 = sand.u32 %s26, 1
        %s123 = smul.addr %s122, 2432
        %s124 = scalar_lea.vmem [#allocation2], %s123
        // Predicated region
        $region25: #{tpu_custom_call.1} parent=23 // pred_check
          %p125 = pneg %p39
        $region26: #{tpu_custom_call.1} parent=23 // pred_check_branch
          %127 = sbr.rel (%p125) target = $region28
        $region27: #{tpu_custom_call.1} parent=23 // pred_region
          %128 = dma.done %s121, 38912
        $region28: #{tpu_custom_call.1} parent=23 // pred_fallthru
          _
        %s129 = sand.u32 %s26, 1
        %s130 = scalar_lea.sflag [#allocation3], %s129
        %s131 = sand.u32 %s26, 1
        %s132 = smul.addr %s131, 2432
        %s133 = scalar_lea.vmem [#allocation2], %s132
        %p134 = pneg %p39
        %p135 = pneg %p36
        %p136 = pneg %p65
        %p137 = pneg %p62
        %s138 = sand.u32 %s52, 1
        %s139 = scalar_lea.sflag [#allocation4], %s138
        %s140 = sand.u32 %s52, 1
        %s141 = smul.addr %s140, 2432
        %s142 = scalar_lea.vmem [#allocation5], %s141
        %s143 = smul.u32 38, %s18
        %s144 = ssub.s32 75, %s143
        %p145 = scmp.lt.s32.totalorder %s144, 38
        %s146 = scalar_select %p145, %s144, 38
        %s147 = smul.u32 128, %s146
        %s148 = smul.u32 %s147, 8
        %s149 = smul.u32 38, %s18
        %s150 = ssub.s32 75, %s149
        %p151 = scmp.lt.s32.totalorder %s150, 38
        %s152 = scalar_select %p151, %s150, 38
        %s153 = smul.u32 128, %s152
        %s154 = smul.u32 %s153, 8
        %v155 = vld [vmem:[%s124] sm:$0xff]
        %v156 = vld [vmem:[%s124 + $0x8] sm:$0xff]
        %v157 = vld [vmem:[%s124 + $0x10] sm:$0xff]
        %v158 = vld [vmem:[%s124 + $0x18] sm:$0xff]
        %v159 = vld [vmem:[%s124 + $0x20] sm:$0xff]
        %v160 = vld [vmem:[%s124 + $0x28] sm:$0xff]
        %v161 = vld [vmem:[%s124 + $0x30] sm:$0xff]
        %v162 = vld [vmem:[%s124 + $0x38] sm:$0xff]
        %v163 = vld [vmem:[%s124 + $0x40] sm:$0xff]
        %v164 = vld [vmem:[%s124 + $0x48] sm:$0xff]
        %v165 = vld [vmem:[%s124 + $0x50] sm:$0xff]
        %v166 = vld [vmem:[%s124 + $0x58] sm:$0xff]
        %v167 = vld [vmem:[%s124 + $0x60] sm:$0xff]
        %v168 = vld [vmem:[%s124 + $0x68] sm:$0xff]
        %v169 = vld [vmem:[%s124 + $0x70] sm:$0xff]
        %v170 = vld [vmem:[%s124 + $0x78] sm:$0xff]
        %v171 = vld [vmem:[%s124 + $0x80] sm:$0xff]
        %v172 = vld [vmem:[%s124 + $0x88] sm:$0xff]
        %v173 = vld [vmem:[%s124 + $0x90] sm:$0xff]
        %v174 = vld [vmem:[%s124 + $0x98] sm:$0xff]
        %v175 = vld [vmem:[%s124 + $0xa0] sm:$0xff]
        %v176 = vld [vmem:[%s124 + $0xa8] sm:$0xff]
        %v177 = vld [vmem:[%s124 + $0xb0] sm:$0xff]
        %v178 = vld [vmem:[%s124 + $0xb8] sm:$0xff]
        %v179 = vld [vmem:[%s124 + $0xc0] sm:$0xff]
        %v180 = vld [vmem:[%s124 + $0xc8] sm:$0xff]
        %v181 = vld [vmem:[%s124 + $0xd0] sm:$0xff]
        %v182 = vld [vmem:[%s124 + $0xd8] sm:$0xff]
        %v183 = vld [vmem:[%s124 + $0xe0] sm:$0xff]
        %v184 = vld [vmem:[%s124 + $0xe8] sm:$0xff]
        %v185 = vld [vmem:[%s124 + $0xf0] sm:$0xff]
        %v186 = vld [vmem:[%s124 + $0xf8] sm:$0xff]
        %v187 = vld [vmem:[%s124 + $0x100] sm:$0xff]
        %v188 = vld [vmem:[%s124 + $0x108] sm:$0xff]
        %v189 = vld [vmem:[%s124 + $0x110] sm:$0xff]
        %v190 = vld [vmem:[%s124 + $0x118] sm:$0xff]
        %v191 = vld [vmem:[%s124 + $0x120] sm:$0xff]
        %v192 = vld [vmem:[%s124 + $0x128] sm:$0xff]
        %v193 = vld [vmem:[%s124 + $0x130] sm:$0xff]
        %v194 = vld [vmem:[%s124 + $0x138] sm:$0xff]
        %v195 = vld [vmem:[%s124 + $0x140] sm:$0xff]
        %v196 = vld [vmem:[%s124 + $0x148] sm:$0xff]
        %v197 = vld [vmem:[%s124 + $0x150] sm:$0xff]
        %v198 = vld [vmem:[%s124 + $0x158] sm:$0xff]
        %v199 = vld [vmem:[%s124 + $0x160] sm:$0xff]
        %v200 = vld [vmem:[%s124 + $0x168] sm:$0xff]
        %v201 = vld [vmem:[%s124 + $0x170] sm:$0xff]
        %v202 = vld [vmem:[%s124 + $0x178] sm:$0xff]
        %v203 = vld [vmem:[%s124 + $0x180] sm:$0xff]
        %v204 = vld [vmem:[%s124 + $0x188] sm:$0xff]
        %v205 = vld [vmem:[%s124 + $0x190] sm:$0xff]
        %v206 = vld [vmem:[%s124 + $0x198] sm:$0xff]
        %v207 = vld [vmem:[%s124 + $0x1a0] sm:$0xff]
        %v208 = vld [vmem:[%s124 + $0x1a8] sm:$0xff]
        %v209 = vld [vmem:[%s124 + $0x1b0] sm:$0xff]
        %v210 = vld [vmem:[%s124 + $0x1b8] sm:$0xff]
        %v211 = vld [vmem:[%s124 + $0x1c0] sm:$0xff]
        %v212 = vld [vmem:[%s124 + $0x1c8] sm:$0xff]
        %v213 = vld [vmem:[%s124 + $0x1d0] sm:$0xff]
        %v214 = vld [vmem:[%s124 + $0x1d8] sm:$0xff]
        %v215 = vld [vmem:[%s124 + $0x1e0] sm:$0xff]
        %v216 = vld [vmem:[%s124 + $0x1e8] sm:$0xff]
        %v217 = vld [vmem:[%s124 + $0x1f0] sm:$0xff]
        %v218 = vld [vmem:[%s124 + $0x1f8] sm:$0xff]
        %v219 = vld [vmem:[%s124 + $0x200] sm:$0xff]
        %v220 = vld [vmem:[%s124 + $0x208] sm:$0xff]
        %v221 = vld [vmem:[%s124 + $0x210] sm:$0xff]
        %v222 = vld [vmem:[%s124 + $0x218] sm:$0xff]
        %v223 = vld [vmem:[%s124 + $0x220] sm:$0xff]
        %v224 = vld [vmem:[%s124 + $0x228] sm:$0xff]
        %v225 = vld [vmem:[%s124 + $0x230] sm:$0xff]
        %v226 = vld [vmem:[%s124 + $0x238] sm:$0xff]
        %v227 = vld [vmem:[%s124 + $0x240] sm:$0xff]
        %v228 = vld [vmem:[%s124 + $0x248] sm:$0xff]
        %v229 = vld [vmem:[%s124 + $0x250] sm:$0xff]
        %v230 = vld [vmem:[%s124 + $0x258] sm:$0xff]
        %v231 = vld [vmem:[%s124 + $0x260] sm:$0xff]
        %v232 = vld [vmem:[%s124 + $0x268] sm:$0xff]
        %v233 = vld [vmem:[%s124 + $0x270] sm:$0xff]
        %v234 = vld [vmem:[%s124 + $0x278] sm:$0xff]
        %v235 = vld [vmem:[%s124 + $0x280] sm:$0xff]
        %v236 = vld [vmem:[%s124 + $0x288] sm:$0xff]
        %v237 = vld [vmem:[%s124 + $0x290] sm:$0xff]
        %v238 = vld [vmem:[%s124 + $0x298] sm:$0xff]
        %v239 = vld [vmem:[%s124 + $0x2a0] sm:$0xff]
        %v240 = vld [vmem:[%s124 + $0x2a8] sm:$0xff]
        %v241 = vld [vmem:[%s124 + $0x2b0] sm:$0xff]
        %v242 = vld [vmem:[%s124 + $0x2b8] sm:$0xff]
        %v243 = vld [vmem:[%s124 + $0x2c0] sm:$0xff]
        %v244 = vld [vmem:[%s124 + $0x2c8] sm:$0xff]
        %v245 = vld [vmem:[%s124 + $0x2d0] sm:$0xff]
        %v246 = vld [vmem:[%s124 + $0x2d8] sm:$0xff]
        %v247 = vld [vmem:[%s124 + $0x2e0] sm:$0xff]
        %v248 = vld [vmem:[%s124 + $0x2e8] sm:$0xff]
        %v249 = vld [vmem:[%s124 + $0x2f0] sm:$0xff]
        %v250 = vld [vmem:[%s124 + $0x2f8] sm:$0xff]
        %v251 = vld [vmem:[%s124 + $0x300] sm:$0xff]
        %v252 = vld [vmem:[%s124 + $0x308] sm:$0xff]
        %v253 = vld [vmem:[%s124 + $0x310] sm:$0xff]
        %v254 = vld [vmem:[%s124 + $0x318] sm:$0xff]
        %v255 = vld [vmem:[%s124 + $0x320] sm:$0xff]
        %v256 = vld [vmem:[%s124 + $0x328] sm:$0xff]
        %v257 = vld [vmem:[%s124 + $0x330] sm:$0xff]
        %v258 = vld [vmem:[%s124 + $0x338] sm:$0xff]
        %v259 = vld [vmem:[%s124 + $0x340] sm:$0xff]
        %v260 = vld [vmem:[%s124 + $0x348] sm:$0xff]
        %v261 = vld [vmem:[%s124 + $0x350] sm:$0xff]
        %v262 = vld [vmem:[%s124 + $0x358] sm:$0xff]
        %v263 = vld [vmem:[%s124 + $0x360] sm:$0xff]
        %v264 = vld [vmem:[%s124 + $0x368] sm:$0xff]
        %v265 = vld [vmem:[%s124 + $0x370] sm:$0xff]
        %v266 = vld [vmem:[%s124 + $0x378] sm:$0xff]
        %v267 = vld [vmem:[%s124 + $0x380] sm:$0xff]
        %v268 = vld [vmem:[%s124 + $0x388] sm:$0xff]
        %v269 = vld [vmem:[%s124 + $0x390] sm:$0xff]
        %v270 = vld [vmem:[%s124 + $0x398] sm:$0xff]
        %v271 = vld [vmem:[%s124 + $0x3a0] sm:$0xff]
        %v272 = vld [vmem:[%s124 + $0x3a8] sm:$0xff]
        %v273 = vld [vmem:[%s124 + $0x3b0] sm:$0xff]
        %v274 = vld [vmem:[%s124 + $0x3b8] sm:$0xff]
        %v275 = vld [vmem:[%s124 + $0x3c0] sm:$0xff]
        %v276 = vld [vmem:[%s124 + $0x3c8] sm:$0xff]
        %v277 = vld [vmem:[%s124 + $0x3d0] sm:$0xff]
        %v278 = vld [vmem:[%s124 + $0x3d8] sm:$0xff]
        %v279 = vld [vmem:[%s124 + $0x3e0] sm:$0xff]
        %v280 = vld [vmem:[%s124 + $0x3e8] sm:$0xff]
        %v281 = vld [vmem:[%s124 + $0x3f0] sm:$0xff]
        %v282 = vld [vmem:[%s124 + $0x3f8] sm:$0xff]
        %v283 = vld [vmem:[%s124 + $0x400] sm:$0xff]
        %v284 = vld [vmem:[%s124 + $0x408] sm:$0xff]
        %v285 = vld [vmem:[%s124 + $0x410] sm:$0xff]
        %v286 = vld [vmem:[%s124 + $0x418] sm:$0xff]
        %v287 = vld [vmem:[%s124 + $0x420] sm:$0xff]
        %v288 = vld [vmem:[%s124 + $0x428] sm:$0xff]
        %v289 = vld [vmem:[%s124 + $0x430] sm:$0xff]
        %v290 = vld [vmem:[%s124 + $0x438] sm:$0xff]
        %v291 = vld [vmem:[%s124 + $0x440] sm:$0xff]
        %v292 = vld [vmem:[%s124 + $0x448] sm:$0xff]
        %v293 = vld [vmem:[%s124 + $0x450] sm:$0xff]
        %v294 = vld [vmem:[%s124 + $0x458] sm:$0xff]
        %v295 = vld [vmem:[%s124 + $0x460] sm:$0xff]
        %v296 = vld [vmem:[%s124 + $0x468] sm:$0xff]
        %v297 = vld [vmem:[%s124 + $0x470] sm:$0xff]
        %v298 = vld [vmem:[%s124 + $0x478] sm:$0xff]
        %v299 = vld [vmem:[%s124 + $0x480] sm:$0xff]
        %v300 = vld [vmem:[%s124 + $0x488] sm:$0xff]
        %v301 = vld [vmem:[%s124 + $0x490] sm:$0xff]
        %v302 = vld [vmem:[%s124 + $0x498] sm:$0xff]
        %v303 = vld [vmem:[%s124 + $0x4a0] sm:$0xff]
        %v304 = vld [vmem:[%s124 + $0x4a8] sm:$0xff]
        %v305 = vld [vmem:[%s124 + $0x4b0] sm:$0xff]
        %v306 = vld [vmem:[%s124 + $0x4b8] sm:$0xff]
        %v307 = vld [vmem:[%s124 + $0x4c0] sm:$0xff]
        %v308 = vld [vmem:[%s124 + $0x4c8] sm:$0xff]
        %v309 = vld [vmem:[%s124 + $0x4d0] sm:$0xff]
        %v310 = vld [vmem:[%s124 + $0x4d8] sm:$0xff]
        %v311 = vld [vmem:[%s124 + $0x4e0] sm:$0xff]
        %v312 = vld [vmem:[%s124 + $0x4e8] sm:$0xff]
        %v313 = vld [vmem:[%s124 + $0x4f0] sm:$0xff]
        %v314 = vld [vmem:[%s124 + $0x4f8] sm:$0xff]
        %v315 = vld [vmem:[%s124 + $0x500] sm:$0xff]
        %v316 = vld [vmem:[%s124 + $0x508] sm:$0xff]
        %v317 = vld [vmem:[%s124 + $0x510] sm:$0xff]
        %v318 = vld [vmem:[%s124 + $0x518] sm:$0xff]
        %v319 = vld [vmem:[%s124 + $0x520] sm:$0xff]
        %v320 = vld [vmem:[%s124 + $0x528] sm:$0xff]
        %v321 = vld [vmem:[%s124 + $0x530] sm:$0xff]
        %v322 = vld [vmem:[%s124 + $0x538] sm:$0xff]
        %v323 = vld [vmem:[%s124 + $0x540] sm:$0xff]
        %v324 = vld [vmem:[%s124 + $0x548] sm:$0xff]
        %v325 = vld [vmem:[%s124 + $0x550] sm:$0xff]
        %v326 = vld [vmem:[%s124 + $0x558] sm:$0xff]
        %v327 = vld [vmem:[%s124 + $0x560] sm:$0xff]
        %v328 = vld [vmem:[%s124 + $0x568] sm:$0xff]
        %v329 = vld [vmem:[%s124 + $0x570] sm:$0xff]
        %v330 = vld [vmem:[%s124 + $0x578] sm:$0xff]
        %v331 = vld [vmem:[%s124 + $0x580] sm:$0xff]
        %v332 = vld [vmem:[%s124 + $0x588] sm:$0xff]
        %v333 = vld [vmem:[%s124 + $0x590] sm:$0xff]
        %v334 = vld [vmem:[%s124 + $0x598] sm:$0xff]
        %v335 = vld [vmem:[%s124 + $0x5a0] sm:$0xff]
        %v336 = vld [vmem:[%s124 + $0x5a8] sm:$0xff]
        %v337 = vld [vmem:[%s124 + $0x5b0] sm:$0xff]
        %v338 = vld [vmem:[%s124 + $0x5b8] sm:$0xff]
        %v339 = vld [vmem:[%s124 + $0x5c0] sm:$0xff]
        %v340 = vld [vmem:[%s124 + $0x5c8] sm:$0xff]
        %v341 = vld [vmem:[%s124 + $0x5d0] sm:$0xff]
        %v342 = vld [vmem:[%s124 + $0x5d8] sm:$0xff]
        %v343 = vld [vmem:[%s124 + $0x5e0] sm:$0xff]
        %v344 = vld [vmem:[%s124 + $0x5e8] sm:$0xff]
        %v345 = vld [vmem:[%s124 + $0x5f0] sm:$0xff]
        %v346 = vld [vmem:[%s124 + $0x5f8] sm:$0xff]
        %v347 = vld [vmem:[%s124 + $0x600] sm:$0xff]
        %v348 = vld [vmem:[%s124 + $0x608] sm:$0xff]
        %v349 = vld [vmem:[%s124 + $0x610] sm:$0xff]
        %v350 = vld [vmem:[%s124 + $0x618] sm:$0xff]
        %v351 = vld [vmem:[%s124 + $0x620] sm:$0xff]
        %v352 = vld [vmem:[%s124 + $0x628] sm:$0xff]
        %v353 = vld [vmem:[%s124 + $0x630] sm:$0xff]
        %v354 = vld [vmem:[%s124 + $0x638] sm:$0xff]
        %v355 = vld [vmem:[%s124 + $0x640] sm:$0xff]
        %v356 = vld [vmem:[%s124 + $0x648] sm:$0xff]
        %v357 = vld [vmem:[%s124 + $0x650] sm:$0xff]
        %v358 = vld [vmem:[%s124 + $0x658] sm:$0xff]
        %v359 = vld [vmem:[%s124 + $0x660] sm:$0xff]
        %v360 = vld [vmem:[%s124 + $0x668] sm:$0xff]
        %v361 = vld [vmem:[%s124 + $0x670] sm:$0xff]
        %v362 = vld [vmem:[%s124 + $0x678] sm:$0xff]
        %v363 = vld [vmem:[%s124 + $0x680] sm:$0xff]
        %v364 = vld [vmem:[%s124 + $0x688] sm:$0xff]
        %v365 = vld [vmem:[%s124 + $0x690] sm:$0xff]
        %v366 = vld [vmem:[%s124 + $0x698] sm:$0xff]
        %v367 = vld [vmem:[%s124 + $0x6a0] sm:$0xff]
        %v368 = vld [vmem:[%s124 + $0x6a8] sm:$0xff]
        %v369 = vld [vmem:[%s124 + $0x6b0] sm:$0xff]
        %v370 = vld [vmem:[%s124 + $0x6b8] sm:$0xff]
        %v371 = vld [vmem:[%s124 + $0x6c0] sm:$0xff]
        %v372 = vld [vmem:[%s124 + $0x6c8] sm:$0xff]
        %v373 = vld [vmem:[%s124 + $0x6d0] sm:$0xff]
        %v374 = vld [vmem:[%s124 + $0x6d8] sm:$0xff]
        %v375 = vld [vmem:[%s124 + $0x6e0] sm:$0xff]
        %v376 = vld [vmem:[%s124 + $0x6e8] sm:$0xff]
        %v377 = vld [vmem:[%s124 + $0x6f0] sm:$0xff]
        %v378 = vld [vmem:[%s124 + $0x6f8] sm:$0xff]
        %v379 = vld [vmem:[%s124 + $0x700] sm:$0xff]
        %v380 = vld [vmem:[%s124 + $0x708] sm:$0xff]
        %v381 = vld [vmem:[%s124 + $0x710] sm:$0xff]
        %v382 = vld [vmem:[%s124 + $0x718] sm:$0xff]
        %v383 = vld [vmem:[%s124 + $0x720] sm:$0xff]
        %v384 = vld [vmem:[%s124 + $0x728] sm:$0xff]
        %v385 = vld [vmem:[%s124 + $0x730] sm:$0xff]
        %v386 = vld [vmem:[%s124 + $0x738] sm:$0xff]
        %v387 = vld [vmem:[%s124 + $0x740] sm:$0xff]
        %v388 = vld [vmem:[%s124 + $0x748] sm:$0xff]
        %v389 = vld [vmem:[%s124 + $0x750] sm:$0xff]
        %v390 = vld [vmem:[%s124 + $0x758] sm:$0xff]
        %v391 = vld [vmem:[%s124 + $0x760] sm:$0xff]
        %v392 = vld [vmem:[%s124 + $0x768] sm:$0xff]
        %v393 = vld [vmem:[%s124 + $0x770] sm:$0xff]
        %v394 = vld [vmem:[%s124 + $0x778] sm:$0xff]
        %v395 = vld [vmem:[%s124 + $0x780] sm:$0xff]
        %v396 = vld [vmem:[%s124 + $0x788] sm:$0xff]
        %v397 = vld [vmem:[%s124 + $0x790] sm:$0xff]
        %v398 = vld [vmem:[%s124 + $0x798] sm:$0xff]
        %v399 = vld [vmem:[%s124 + $0x7a0] sm:$0xff]
        %v400 = vld [vmem:[%s124 + $0x7a8] sm:$0xff]
        %v401 = vld [vmem:[%s124 + $0x7b0] sm:$0xff]
        %v402 = vld [vmem:[%s124 + $0x7b8] sm:$0xff]
        %v403 = vld [vmem:[%s124 + $0x7c0] sm:$0xff]
        %v404 = vld [vmem:[%s124 + $0x7c8] sm:$0xff]
        %v405 = vld [vmem:[%s124 + $0x7d0] sm:$0xff]
        %v406 = vld [vmem:[%s124 + $0x7d8] sm:$0xff]
        %v407 = vld [vmem:[%s124 + $0x7e0] sm:$0xff]
        %v408 = vld [vmem:[%s124 + $0x7e8] sm:$0xff]
        %v409 = vld [vmem:[%s124 + $0x7f0] sm:$0xff]
        %v410 = vld [vmem:[%s124 + $0x7f8] sm:$0xff]
        %v411 = vld [vmem:[%s124 + $0x800] sm:$0xff]
        %v412 = vld [vmem:[%s124 + $0x808] sm:$0xff]
        %v413 = vld [vmem:[%s124 + $0x810] sm:$0xff]
        %v414 = vld [vmem:[%s124 + $0x818] sm:$0xff]
        %v415 = vld [vmem:[%s124 + $0x820] sm:$0xff]
        %v416 = vld [vmem:[%s124 + $0x828] sm:$0xff]
        %v417 = vld [vmem:[%s124 + $0x830] sm:$0xff]
        %v418 = vld [vmem:[%s124 + $0x838] sm:$0xff]
        %v419 = vld [vmem:[%s124 + $0x840] sm:$0xff]
        %v420 = vld [vmem:[%s124 + $0x848] sm:$0xff]
        %v421 = vld [vmem:[%s124 + $0x850] sm:$0xff]
        %v422 = vld [vmem:[%s124 + $0x858] sm:$0xff]
        %v423 = vld [vmem:[%s124 + $0x860] sm:$0xff]
        %v424 = vld [vmem:[%s124 + $0x868] sm:$0xff]
        %v425 = vld [vmem:[%s124 + $0x870] sm:$0xff]
        %v426 = vld [vmem:[%s124 + $0x878] sm:$0xff]
        %v427 = vld [vmem:[%s124 + $0x880] sm:$0xff]
        %v428 = vld [vmem:[%s124 + $0x888] sm:$0xff]
        %v429 = vld [vmem:[%s124 + $0x890] sm:$0xff]
        %v430 = vld [vmem:[%s124 + $0x898] sm:$0xff]
        %v431 = vld [vmem:[%s124 + $0x8a0] sm:$0xff]
        %v432 = vld [vmem:[%s124 + $0x8a8] sm:$0xff]
        %v433 = vld [vmem:[%s124 + $0x8b0] sm:$0xff]
        %v434 = vld [vmem:[%s124 + $0x8b8] sm:$0xff]
        %v435 = vld [vmem:[%s124 + $0x8c0] sm:$0xff]
        %v436 = vld [vmem:[%s124 + $0x8c8] sm:$0xff]
        %v437 = vld [vmem:[%s124 + $0x8d0] sm:$0xff]
        %v438 = vld [vmem:[%s124 + $0x8d8] sm:$0xff]
        %v439 = vld [vmem:[%s124 + $0x8e0] sm:$0xff]
        %v440 = vld [vmem:[%s124 + $0x8e8] sm:$0xff]
        %v441 = vld [vmem:[%s124 + $0x8f0] sm:$0xff]
        %v442 = vld [vmem:[%s124 + $0x8f8] sm:$0xff]
        %v443 = vld [vmem:[%s124 + $0x900] sm:$0xff]
        %v444 = vld [vmem:[%s124 + $0x908] sm:$0xff]
        %v445 = vld [vmem:[%s124 + $0x910] sm:$0xff]
        %v446 = vld [vmem:[%s124 + $0x918] sm:$0xff]
        %v447 = vld [vmem:[%s124 + $0x920] sm:$0xff]
        %v448 = vld [vmem:[%s124 + $0x928] sm:$0xff]
        %v449 = vld [vmem:[%s124 + $0x930] sm:$0xff]
        %v450 = vld [vmem:[%s124 + $0x938] sm:$0xff]
        %v451 = vld [vmem:[%s124 + $0x940] sm:$0xff]
        %v452 = vld [vmem:[%s124 + $0x948] sm:$0xff]
        %v453 = vld [vmem:[%s124 + $0x950] sm:$0xff]
        %v454 = vld [vmem:[%s124 + $0x958] sm:$0xff]
        %v455 = vld [vmem:[%s124 + $0x960] sm:$0xff]
        %v456 = vld [vmem:[%s124 + $0x968] sm:$0xff]
        %v457 = vld [vmem:[%s124 + $0x970] sm:$0xff]
        %v458 = vld [vmem:[%s124 + $0x978] sm:$0xff]
        %v459 = vmul.f32 %v155, -0.5
        %v460 = vmul.f32 %v156, -0.5
        %v461 = vmul.f32 %v157, -0.5
        %v462 = vmul.f32 %v158, -0.5
        %v463 = vmul.f32 %v159, -0.5
        %v464 = vmul.f32 %v160, -0.5
        %v465 = vmul.f32 %v161, -0.5
        %v466 = vmul.f32 %v162, -0.5
        %v467 = vmul.f32 %v163, -0.5
        %v468 = vmul.f32 %v164, -0.5
        %v469 = vmul.f32 %v165, -0.5
        %v470 = vmul.f32 %v166, -0.5
        %v471 = vmul.f32 %v167, -0.5
        %v472 = vmul.f32 %v168, -0.5
        %v473 = vmul.f32 %v169, -0.5
        %v474 = vmul.f32 %v170, -0.5
        %v475 = vmul.f32 %v171, -0.5
        %v476 = vmul.f32 %v172, -0.5
        %v477 = vmul.f32 %v173, -0.5
        %v478 = vmul.f32 %v174, -0.5
        %v479 = vmul.f32 %v175, -0.5
        %v480 = vmul.f32 %v176, -0.5
        %v481 = vmul.f32 %v177, -0.5
        %v482 = vmul.f32 %v178, -0.5
        %v483 = vmul.f32 %v179, -0.5
        %v484 = vmul.f32 %v180, -0.5
        %v485 = vmul.f32 %v181, -0.5
        %v486 = vmul.f32 %v182, -0.5
        %v487 = vmul.f32 %v183, -0.5
        %v488 = vmul.f32 %v184, -0.5
        %v489 = vmul.f32 %v185, -0.5
        %v490 = vmul.f32 %v186, -0.5
        %v491 = vmul.f32 %v187, -0.5
        %v492 = vmul.f32 %v188, -0.5
        %v493 = vmul.f32 %v189, -0.5
        %v494 = vmul.f32 %v190, -0.5
        %v495 = vmul.f32 %v191, -0.5
        %v496 = vmul.f32 %v192, -0.5
        %v497 = vmul.f32 %v193, -0.5
        %v498 = vmul.f32 %v194, -0.5
        %v499 = vmul.f32 %v195, -0.5
        %v500 = vmul.f32 %v196, -0.5
        %v501 = vmul.f32 %v197, -0.5
        %v502 = vmul.f32 %v198, -0.5
        %v503 = vmul.f32 %v199, -0.5
        %v504 = vmul.f32 %v200, -0.5
        %v505 = vmul.f32 %v201, -0.5
        %v506 = vmul.f32 %v202, -0.5
        %v507 = vmul.f32 %v203, -0.5
        %v508 = vmul.f32 %v204, -0.5
        %v509 = vmul.f32 %v205, -0.5
        %v510 = vmul.f32 %v206, -0.5
        %v511 = vmul.f32 %v207, -0.5
        %v512 = vmul.f32 %v208, -0.5
        %v513 = vmul.f32 %v209, -0.5
        %v514 = vmul.f32 %v210, -0.5
        %v515 = vmul.f32 %v211, -0.5
        %v516 = vmul.f32 %v212, -0.5
        %v517 = vmul.f32 %v213, -0.5
        %v518 = vmul.f32 %v214, -0.5
        %v519 = vmul.f32 %v215, -0.5
        %v520 = vmul.f32 %v216, -0.5
        %v521 = vmul.f32 %v217, -0.5
        %v522 = vmul.f32 %v218, -0.5
        %v523 = vmul.f32 %v219, -0.5
        %v524 = vmul.f32 %v220, -0.5
        %v525 = vmul.f32 %v221, -0.5
        %v526 = vmul.f32 %v222, -0.5
        %v527 = vmul.f32 %v223, -0.5
        %v528 = vmul.f32 %v224, -0.5
        %v529 = vmul.f32 %v225, -0.5
        %v530 = vmul.f32 %v226, -0.5
        %v531 = vmul.f32 %v227, -0.5
        %v532 = vmul.f32 %v228, -0.5
        %v533 = vmul.f32 %v229, -0.5
        %v534 = vmul.f32 %v230, -0.5
        %v535 = vmul.f32 %v231, -0.5
        %v536 = vmul.f32 %v232, -0.5
        %v537 = vmul.f32 %v233, -0.5
        %v538 = vmul.f32 %v234, -0.5
        %v539 = vmul.f32 %v235, -0.5
        %v540 = vmul.f32 %v236, -0.5
        %v541 = vmul.f32 %v237, -0.5
        %v542 = vmul.f32 %v238, -0.5
        %v543 = vmul.f32 %v239, -0.5
        %v544 = vmul.f32 %v240, -0.5
        %v545 = vmul.f32 %v241, -0.5
        %v546 = vmul.f32 %v242, -0.5
        %v547 = vmul.f32 %v243, -0.5
        %v548 = vmul.f32 %v244, -0.5
        %v549 = vmul.f32 %v245, -0.5
        %v550 = vmul.f32 %v246, -0.5
        %v551 = vmul.f32 %v247, -0.5
        %v552 = vmul.f32 %v248, -0.5
        %v553 = vmul.f32 %v249, -0.5
        %v554 = vmul.f32 %v250, -0.5
        %v555 = vmul.f32 %v251, -0.5
        %v556 = vmul.f32 %v252, -0.5
        %v557 = vmul.f32 %v253, -0.5
        %v558 = vmul.f32 %v254, -0.5
        %v559 = vmul.f32 %v255, -0.5
        %v560 = vmul.f32 %v256, -0.5
        %v561 = vmul.f32 %v257, -0.5
        %v562 = vmul.f32 %v258, -0.5
        %v563 = vmul.f32 %v259, -0.5
        %v564 = vmul.f32 %v260, -0.5
        %v565 = vmul.f32 %v261, -0.5
        %v566 = vmul.f32 %v262, -0.5
        %v567 = vmul.f32 %v263, -0.5
        %v568 = vmul.f32 %v264, -0.5
        %v569 = vmul.f32 %v265, -0.5
        %v570 = vmul.f32 %v266, -0.5
        %v571 = vmul.f32 %v267, -0.5
        %v572 = vmul.f32 %v268, -0.5
        %v573 = vmul.f32 %v269, -0.5
        %v574 = vmul.f32 %v270, -0.5
        %v575 = vmul.f32 %v271, -0.5
        %v576 = vmul.f32 %v272, -0.5
        %v577 = vmul.f32 %v273, -0.5
        %v578 = vmul.f32 %v274, -0.5
        %v579 = vmul.f32 %v275, -0.5
        %v580 = vmul.f32 %v276, -0.5
        %v581 = vmul.f32 %v277, -0.5
        %v582 = vmul.f32 %v278, -0.5
        %v583 = vmul.f32 %v279, -0.5
        %v584 = vmul.f32 %v280, -0.5
        %v585 = vmul.f32 %v281, -0.5
        %v586 = vmul.f32 %v282, -0.5
        %v587 = vmul.f32 %v283, -0.5
        %v588 = vmul.f32 %v284, -0.5
        %v589 = vmul.f32 %v285, -0.5
        %v590 = vmul.f32 %v286, -0.5
        %v591 = vmul.f32 %v287, -0.5
        %v592 = vmul.f32 %v288, -0.5
        %v593 = vmul.f32 %v289, -0.5
        %v594 = vmul.f32 %v290, -0.5
        %v595 = vmul.f32 %v291, -0.5
        %v596 = vmul.f32 %v292, -0.5
        %v597 = vmul.f32 %v293, -0.5
        %v598 = vmul.f32 %v294, -0.5
        %v599 = vmul.f32 %v295, -0.5
        %v600 = vmul.f32 %v296, -0.5
        %v601 = vmul.f32 %v297, -0.5
        %v602 = vmul.f32 %v298, -0.5
        %v603 = vmul.f32 %v299, -0.5
        %v604 = vmul.f32 %v300, -0.5
        %v605 = vmul.f32 %v301, -0.5
        %v606 = vmul.f32 %v302, -0.5
        %v607 = vmul.f32 %v303, -0.5
        %v608 = vmul.f32 %v304, -0.5
        %v609 = vmul.f32 %v305, -0.5
        %v610 = vmul.f32 %v306, -0.5
        %v611 = vmul.f32 %v307, -0.5
        %v612 = vmul.f32 %v308, -0.5
        %v613 = vmul.f32 %v309, -0.5
        %v614 = vmul.f32 %v310, -0.5
        %v615 = vmul.f32 %v311, -0.5
        %v616 = vmul.f32 %v312, -0.5
        %v617 = vmul.f32 %v313, -0.5
        %v618 = vmul.f32 %v314, -0.5
        %v619 = vmul.f32 %v315, -0.5
        %v620 = vmul.f32 %v316, -0.5
        %v621 = vmul.f32 %v317, -0.5
        %v622 = vmul.f32 %v318, -0.5
        %v623 = vmul.f32 %v319, -0.5
        %v624 = vmul.f32 %v320, -0.5
        %v625 = vmul.f32 %v321, -0.5
        %v626 = vmul.f32 %v322, -0.5
        %v627 = vmul.f32 %v323, -0.5
        %v628 = vmul.f32 %v324, -0.5
        %v629 = vmul.f32 %v325, -0.5
        %v630 = vmul.f32 %v326, -0.5
        %v631 = vmul.f32 %v327, -0.5
        %v632 = vmul.f32 %v328, -0.5
        %v633 = vmul.f32 %v329, -0.5
        %v634 = vmul.f32 %v330, -0.5
        %v635 = vmul.f32 %v331, -0.5
        %v636 = vmul.f32 %v332, -0.5
        %v637 = vmul.f32 %v333, -0.5
        %v638 = vmul.f32 %v334, -0.5
        %v639 = vmul.f32 %v335, -0.5
        %v640 = vmul.f32 %v336, -0.5
        %v641 = vmul.f32 %v337, -0.5
        %v642 = vmul.f32 %v338, -0.5
        %v643 = vmul.f32 %v339, -0.5
        %v644 = vmul.f32 %v340, -0.5
        %v645 = vmul.f32 %v341, -0.5
        %v646 = vmul.f32 %v342, -0.5
        %v647 = vmul.f32 %v343, -0.5
        %v648 = vmul.f32 %v344, -0.5
        %v649 = vmul.f32 %v345, -0.5
        %v650 = vmul.f32 %v346, -0.5
        %v651 = vmul.f32 %v347, -0.5
        %v652 = vmul.f32 %v348, -0.5
        %v653 = vmul.f32 %v349, -0.5
        %v654 = vmul.f32 %v350, -0.5
        %v655 = vmul.f32 %v351, -0.5
        %v656 = vmul.f32 %v352, -0.5
        %v657 = vmul.f32 %v353, -0.5
        %v658 = vmul.f32 %v354, -0.5
        %v659 = vmul.f32 %v355, -0.5
        %v660 = vmul.f32 %v356, -0.5
        %v661 = vmul.f32 %v357, -0.5
        %v662 = vmul.f32 %v358, -0.5
        %v663 = vmul.f32 %v359, -0.5
        %v664 = vmul.f32 %v360, -0.5
        %v665 = vmul.f32 %v361, -0.5
        %v666 = vmul.f32 %v362, -0.5
        %v667 = vmul.f32 %v363, -0.5
        %v668 = vmul.f32 %v364, -0.5
        %v669 = vmul.f32 %v365, -0.5
        %v670 = vmul.f32 %v366, -0.5
        %v671 = vmul.f32 %v367, -0.5
        %v672 = vmul.f32 %v368, -0.5
        %v673 = vmul.f32 %v369, -0.5
        %v674 = vmul.f32 %v370, -0.5
        %v675 = vmul.f32 %v371, -0.5
        %v676 = vmul.f32 %v372, -0.5
        %v677 = vmul.f32 %v373, -0.5
        %v678 = vmul.f32 %v374, -0.5
        %v679 = vmul.f32 %v375, -0.5
        %v680 = vmul.f32 %v376, -0.5
        %v681 = vmul.f32 %v377, -0.5
        %v682 = vmul.f32 %v378, -0.5
        %v683 = vmul.f32 %v379, -0.5
        %v684 = vmul.f32 %v380, -0.5
        %v685 = vmul.f32 %v381, -0.5
        %v686 = vmul.f32 %v382, -0.5
        %v687 = vmul.f32 %v383, -0.5
        %v688 = vmul.f32 %v384, -0.5
        %v689 = vmul.f32 %v385, -0.5
        %v690 = vmul.f32 %v386, -0.5
        %v691 = vmul.f32 %v387, -0.5
        %v692 = vmul.f32 %v388, -0.5
        %v693 = vmul.f32 %v389, -0.5
        %v694 = vmul.f32 %v390, -0.5
        %v695 = vmul.f32 %v391, -0.5
        %v696 = vmul.f32 %v392, -0.5
        %v697 = vmul.f32 %v393, -0.5
        %v698 = vmul.f32 %v394, -0.5
        %v699 = vmul.f32 %v395, -0.5
        %v700 = vmul.f32 %v396, -0.5
        %v701 = vmul.f32 %v397, -0.5
        %v702 = vmul.f32 %v398, -0.5
        %v703 = vmul.f32 %v399, -0.5
        %v704 = vmul.f32 %v400, -0.5
        %v705 = vmul.f32 %v401, -0.5
        %v706 = vmul.f32 %v402, -0.5
        %v707 = vmul.f32 %v403, -0.5
        %v708 = vmul.f32 %v404, -0.5
        %v709 = vmul.f32 %v405, -0.5
        %v710 = vmul.f32 %v406, -0.5
        %v711 = vmul.f32 %v407, -0.5
        %v712 = vmul.f32 %v408, -0.5
        %v713 = vmul.f32 %v409, -0.5
        %v714 = vmul.f32 %v410, -0.5
        %v715 = vmul.f32 %v411, -0.5
        %v716 = vmul.f32 %v412, -0.5
        %v717 = vmul.f32 %v413, -0.5
        %v718 = vmul.f32 %v414, -0.5
        %v719 = vmul.f32 %v415, -0.5
        %v720 = vmul.f32 %v416, -0.5
        %v721 = vmul.f32 %v417, -0.5
        %v722 = vmul.f32 %v418, -0.5
        %v723 = vmul.f32 %v419, -0.5
        %v724 = vmul.f32 %v420, -0.5
        %v725 = vmul.f32 %v421, -0.5
        %v726 = vmul.f32 %v422, -0.5
        %v727 = vmul.f32 %v423, -0.5
        %v728 = vmul.f32 %v424, -0.5
        %v729 = vmul.f32 %v425, -0.5
        %v730 = vmul.f32 %v426, -0.5
        %v731 = vmul.f32 %v427, -0.5
        %v732 = vmul.f32 %v428, -0.5
        %v733 = vmul.f32 %v429, -0.5
        %v734 = vmul.f32 %v430, -0.5
        %v735 = vmul.f32 %v431, -0.5
        %v736 = vmul.f32 %v432, -0.5
        %v737 = vmul.f32 %v433, -0.5
        %v738 = vmul.f32 %v434, -0.5
        %v739 = vmul.f32 %v435, -0.5
        %v740 = vmul.f32 %v436, -0.5
        %v741 = vmul.f32 %v437, -0.5
        %v742 = vmul.f32 %v438, -0.5
        %v743 = vmul.f32 %v439, -0.5
        %v744 = vmul.f32 %v440, -0.5
        %v745 = vmul.f32 %v441, -0.5
        %v746 = vmul.f32 %v442, -0.5
        %v747 = vmul.f32 %v443, -0.5
        %v748 = vmul.f32 %v444, -0.5
        %v749 = vmul.f32 %v445, -0.5
        %v750 = vmul.f32 %v446, -0.5
        %v751 = vmul.f32 %v447, -0.5
        %v752 = vmul.f32 %v448, -0.5
        %v753 = vmul.f32 %v449, -0.5
        %v754 = vmul.f32 %v450, -0.5
        %v755 = vmul.f32 %v451, -0.5
        %v756 = vmul.f32 %v452, -0.5
        %v757 = vmul.f32 %v453, -0.5
        %v758 = vmul.f32 %v454, -0.5
        %v759 = vmul.f32 %v455, -0.5
        %v760 = vmul.f32 %v456, -0.5
        %v761 = vmul.f32 %v457, -0.5
        %v762 = vmul.f32 %v458, -0.5
        %763 = vst [vmem:[%s142] sm:$0xff] %v459
        %764 = vst [vmem:[%s142 + $0x8] sm:$0xff] %v460
        %765 = vst [vmem:[%s142 + $0x10] sm:$0xff] %v461
        %766 = vst [vmem:[%s142 + $0x18] sm:$0xff] %v462
        %767 = vst [vmem:[%s142 + $0x20] sm:$0xff] %v463
        %768 = vst [vmem:[%s142 + $0x28] sm:$0xff] %v464
        %769 = vst [vmem:[%s142 + $0x30] sm:$0xff] %v465
        %770 = vst [vmem:[%s142 + $0x38] sm:$0xff] %v466
        %771 = vst [vmem:[%s142 + $0x40] sm:$0xff] %v467
        %772 = vst [vmem:[%s142 + $0x48] sm:$0xff] %v468
        %773 = vst [vmem:[%s142 + $0x50] sm:$0xff] %v469
        %774 = vst [vmem:[%s142 + $0x58] sm:$0xff] %v470
        %775 = vst [vmem:[%s142 + $0x60] sm:$0xff] %v471
        %776 = vst [vmem:[%s142 + $0x68] sm:$0xff] %v472
        %777 = vst [vmem:[%s142 + $0x70] sm:$0xff] %v473
        %778 = vst [vmem:[%s142 + $0x78] sm:$0xff] %v474
        %779 = vst [vmem:[%s142 + $0x80] sm:$0xff] %v475
        %780 = vst [vmem:[%s142 + $0x88] sm:$0xff] %v476
        %781 = vst [vmem:[%s142 + $0x90] sm:$0xff] %v477
        %782 = vst [vmem:[%s142 + $0x98] sm:$0xff] %v478
        %783 = vst [vmem:[%s142 + $0xa0] sm:$0xff] %v479
        %784 = vst [vmem:[%s142 + $0xa8] sm:$0xff] %v480
        %785 = vst [vmem:[%s142 + $0xb0] sm:$0xff] %v481
        %786 = vst [vmem:[%s142 + $0xb8] sm:$0xff] %v482
        %787 = vst [vmem:[%s142 + $0xc0] sm:$0xff] %v483
        %788 = vst [vmem:[%s142 + $0xc8] sm:$0xff] %v484
        %789 = vst [vmem:[%s142 + $0xd0] sm:$0xff] %v485
        %790 = vst [vmem:[%s142 + $0xd8] sm:$0xff] %v486
        %791 = vst [vmem:[%s142 + $0xe0] sm:$0xff] %v487
        %792 = vst [vmem:[%s142 + $0xe8] sm:$0xff] %v488
        %793 = vst [vmem:[%s142 + $0xf0] sm:$0xff] %v489
        %794 = vst [vmem:[%s142 + $0xf8] sm:$0xff] %v490
        %795 = vst [vmem:[%s142 + $0x100] sm:$0xff] %v491
        %796 = vst [vmem:[%s142 + $0x108] sm:$0xff] %v492
        %797 = vst [vmem:[%s142 + $0x110] sm:$0xff] %v493
        %798 = vst [vmem:[%s142 + $0x118] sm:$0xff] %v494
        %799 = vst [vmem:[%s142 + $0x120] sm:$0xff] %v495
        %800 = vst [vmem:[%s142 + $0x128] sm:$0xff] %v496
        %801 = vst [vmem:[%s142 + $0x130] sm:$0xff] %v497
        %802 = vst [vmem:[%s142 + $0x138] sm:$0xff] %v498
        %803 = vst [vmem:[%s142 + $0x140] sm:$0xff] %v499
        %804 = vst [vmem:[%s142 + $0x148] sm:$0xff] %v500
        %805 = vst [vmem:[%s142 + $0x150] sm:$0xff] %v501
        %806 = vst [vmem:[%s142 + $0x158] sm:$0xff] %v502
        %807 = vst [vmem:[%s142 + $0x160] sm:$0xff] %v503
        %808 = vst [vmem:[%s142 + $0x168] sm:$0xff] %v504
        %809 = vst [vmem:[%s142 + $0x170] sm:$0xff] %v505
        %810 = vst [vmem:[%s142 + $0x178] sm:$0xff] %v506
        %811 = vst [vmem:[%s142 + $0x180] sm:$0xff] %v507
        %812 = vst [vmem:[%s142 + $0x188] sm:$0xff] %v508
        %813 = vst [vmem:[%s142 + $0x190] sm:$0xff] %v509
        %814 = vst [vmem:[%s142 + $0x198] sm:$0xff] %v510
        %815 = vst [vmem:[%s142 + $0x1a0] sm:$0xff] %v511
        %816 = vst [vmem:[%s142 + $0x1a8] sm:$0xff] %v512
        %817 = vst [vmem:[%s142 + $0x1b0] sm:$0xff] %v513
        %818 = vst [vmem:[%s142 + $0x1b8] sm:$0xff] %v514
        %819 = vst [vmem:[%s142 + $0x1c0] sm:$0xff] %v515
        %820 = vst [vmem:[%s142 + $0x1c8] sm:$0xff] %v516
        %821 = vst [vmem:[%s142 + $0x1d0] sm:$0xff] %v517
        %822 = vst [vmem:[%s142 + $0x1d8] sm:$0xff] %v518
        %823 = vst [vmem:[%s142 + $0x1e0] sm:$0xff] %v519
        %824 = vst [vmem:[%s142 + $0x1e8] sm:$0xff] %v520
        %825 = vst [vmem:[%s142 + $0x1f0] sm:$0xff] %v521
        %826 = vst [vmem:[%s142 + $0x1f8] sm:$0xff] %v522
        %827 = vst [vmem:[%s142 + $0x200] sm:$0xff] %v523
        %828 = vst [vmem:[%s142 + $0x208] sm:$0xff] %v524
        %829 = vst [vmem:[%s142 + $0x210] sm:$0xff] %v525
        %830 = vst [vmem:[%s142 + $0x218] sm:$0xff] %v526
        %831 = vst [vmem:[%s142 + $0x220] sm:$0xff] %v527
        %832 = vst [vmem:[%s142 + $0x228] sm:$0xff] %v528
        %833 = vst [vmem:[%s142 + $0x230] sm:$0xff] %v529
        %834 = vst [vmem:[%s142 + $0x238] sm:$0xff] %v530
        %835 = vst [vmem:[%s142 + $0x240] sm:$0xff] %v531
        %836 = vst [vmem:[%s142 + $0x248] sm:$0xff] %v532
        %837 = vst [vmem:[%s142 + $0x250] sm:$0xff] %v533
        %838 = vst [vmem:[%s142 + $0x258] sm:$0xff] %v534
        %839 = vst [vmem:[%s142 + $0x260] sm:$0xff] %v535
        %840 = vst [vmem:[%s142 + $0x268] sm:$0xff] %v536
        %841 = vst [vmem:[%s142 + $0x270] sm:$0xff] %v537
        %842 = vst [vmem:[%s142 + $0x278] sm:$0xff] %v538
        %843 = vst [vmem:[%s142 + $0x280] sm:$0xff] %v539
        %844 = vst [vmem:[%s142 + $0x288] sm:$0xff] %v540
        %845 = vst [vmem:[%s142 + $0x290] sm:$0xff] %v541
        %846 = vst [vmem:[%s142 + $0x298] sm:$0xff] %v542
        %847 = vst [vmem:[%s142 + $0x2a0] sm:$0xff] %v543
        %848 = vst [vmem:[%s142 + $0x2a8] sm:$0xff] %v544
        %849 = vst [vmem:[%s142 + $0x2b0] sm:$0xff] %v545
        %850 = vst [vmem:[%s142 + $0x2b8] sm:$0xff] %v546
        %851 = vst [vmem:[%s142 + $0x2c0] sm:$0xff] %v547
        %852 = vst [vmem:[%s142 + $0x2c8] sm:$0xff] %v548
        %853 = vst [vmem:[%s142 + $0x2d0] sm:$0xff] %v549
        %854 = vst [vmem:[%s142 + $0x2d8] sm:$0xff] %v550
        %855 = vst [vmem:[%s142 + $0x2e0] sm:$0xff] %v551
        %856 = vst [vmem:[%s142 + $0x2e8] sm:$0xff] %v552
        %857 = vst [vmem:[%s142 + $0x2f0] sm:$0xff] %v553
        %858 = vst [vmem:[%s142 + $0x2f8] sm:$0xff] %v554
        %859 = vst [vmem:[%s142 + $0x300] sm:$0xff] %v555
        %860 = vst [vmem:[%s142 + $0x308] sm:$0xff] %v556
        %861 = vst [vmem:[%s142 + $0x310] sm:$0xff] %v557
        %862 = vst [vmem:[%s142 + $0x318] sm:$0xff] %v558
        %863 = vst [vmem:[%s142 + $0x320] sm:$0xff] %v559
        %864 = vst [vmem:[%s142 + $0x328] sm:$0xff] %v560
        %865 = vst [vmem:[%s142 + $0x330] sm:$0xff] %v561
        %866 = vst [vmem:[%s142 + $0x338] sm:$0xff] %v562
        %867 = vst [vmem:[%s142 + $0x340] sm:$0xff] %v563
        %868 = vst [vmem:[%s142 + $0x348] sm:$0xff] %v564
        %869 = vst [vmem:[%s142 + $0x350] sm:$0xff] %v565
        %870 = vst [vmem:[%s142 + $0x358] sm:$0xff] %v566
        %871 = vst [vmem:[%s142 + $0x360] sm:$0xff] %v567
        %872 = vst [vmem:[%s142 + $0x368] sm:$0xff] %v568
        %873 = vst [vmem:[%s142 + $0x370] sm:$0xff] %v569
        %874 = vst [vmem:[%s142 + $0x378] sm:$0xff] %v570
        %875 = vst [vmem:[%s142 + $0x380] sm:$0xff] %v571
        %876 = vst [vmem:[%s142 + $0x388] sm:$0xff] %v572
        %877 = vst [vmem:[%s142 + $0x390] sm:$0xff] %v573
        %878 = vst [vmem:[%s142 + $0x398] sm:$0xff] %v574
        %879 = vst [vmem:[%s142 + $0x3a0] sm:$0xff] %v575
        %880 = vst [vmem:[%s142 + $0x3a8] sm:$0xff] %v576
        %881 = vst [vmem:[%s142 + $0x3b0] sm:$0xff] %v577
        %882 = vst [vmem:[%s142 + $0x3b8] sm:$0xff] %v578
        %883 = vst [vmem:[%s142 + $0x3c0] sm:$0xff] %v579
        %884 = vst [vmem:[%s142 + $0x3c8] sm:$0xff] %v580
        %885 = vst [vmem:[%s142 + $0x3d0] sm:$0xff] %v581
        %886 = vst [vmem:[%s142 + $0x3d8] sm:$0xff] %v582
        %887 = vst [vmem:[%s142 + $0x3e0] sm:$0xff] %v583
        %888 = vst [vmem:[%s142 + $0x3e8] sm:$0xff] %v584
        %889 = vst [vmem:[%s142 + $0x3f0] sm:$0xff] %v585
        %890 = vst [vmem:[%s142 + $0x3f8] sm:$0xff] %v586
        %891 = vst [vmem:[%s142 + $0x400] sm:$0xff] %v587
        %892 = vst [vmem:[%s142 + $0x408] sm:$0xff] %v588
        %893 = vst [vmem:[%s142 + $0x410] sm:$0xff] %v589
        %894 = vst [vmem:[%s142 + $0x418] sm:$0xff] %v590
        %895 = vst [vmem:[%s142 + $0x420] sm:$0xff] %v591
        %896 = vst [vmem:[%s142 + $0x428] sm:$0xff] %v592
        %897 = vst [vmem:[%s142 + $0x430] sm:$0xff] %v593
        %898 = vst [vmem:[%s142 + $0x438] sm:$0xff] %v594
        %899 = vst [vmem:[%s142 + $0x440] sm:$0xff] %v595
        %900 = vst [vmem:[%s142 + $0x448] sm:$0xff] %v596
        %901 = vst [vmem:[%s142 + $0x450] sm:$0xff] %v597
        %902 = vst [vmem:[%s142 + $0x458] sm:$0xff] %v598
        %903 = vst [vmem:[%s142 + $0x460] sm:$0xff] %v599
        %904 = vst [vmem:[%s142 + $0x468] sm:$0xff] %v600
        %905 = vst [vmem:[%s142 + $0x470] sm:$0xff] %v601
        %906 = vst [vmem:[%s142 + $0x478] sm:$0xff] %v602
        %907 = vst [vmem:[%s142 + $0x480] sm:$0xff] %v603
        %908 = vst [vmem:[%s142 + $0x488] sm:$0xff] %v604
        %909 = vst [vmem:[%s142 + $0x490] sm:$0xff] %v605
        %910 = vst [vmem:[%s142 + $0x498] sm:$0xff] %v606
        %911 = vst [vmem:[%s142 + $0x4a0] sm:$0xff] %v607
        %912 = vst [vmem:[%s142 + $0x4a8] sm:$0xff] %v608
        %913 = vst [vmem:[%s142 + $0x4b0] sm:$0xff] %v609
        %914 = vst [vmem:[%s142 + $0x4b8] sm:$0xff] %v610
        %915 = vst [vmem:[%s142 + $0x4c0] sm:$0xff] %v611
        %916 = vst [vmem:[%s142 + $0x4c8] sm:$0xff] %v612
        %917 = vst [vmem:[%s142 + $0x4d0] sm:$0xff] %v613
        %918 = vst [vmem:[%s142 + $0x4d8] sm:$0xff] %v614
        %919 = vst [vmem:[%s142 + $0x4e0] sm:$0xff] %v615
        %920 = vst [vmem:[%s142 + $0x4e8] sm:$0xff] %v616
        %921 = vst [vmem:[%s142 + $0x4f0] sm:$0xff] %v617
        %922 = vst [vmem:[%s142 + $0x4f8] sm:$0xff] %v618
        %923 = vst [vmem:[%s142 + $0x500] sm:$0xff] %v619
        %924 = vst [vmem:[%s142 + $0x508] sm:$0xff] %v620
        %925 = vst [vmem:[%s142 + $0x510] sm:$0xff] %v621
        %926 = vst [vmem:[%s142 + $0x518] sm:$0xff] %v622
        %927 = vst [vmem:[%s142 + $0x520] sm:$0xff] %v623
        %928 = vst [vmem:[%s142 + $0x528] sm:$0xff] %v624
        %929 = vst [vmem:[%s142 + $0x530] sm:$0xff] %v625
        %930 = vst [vmem:[%s142 + $0x538] sm:$0xff] %v626
        %931 = vst [vmem:[%s142 + $0x540] sm:$0xff] %v627
        %932 = vst [vmem:[%s142 + $0x548] sm:$0xff] %v628
        %933 = vst [vmem:[%s142 + $0x550] sm:$0xff] %v629
        %934 = vst [vmem:[%s142 + $0x558] sm:$0xff] %v630
        %935 = vst [vmem:[%s142 + $0x560] sm:$0xff] %v631
        %936 = vst [vmem:[%s142 + $0x568] sm:$0xff] %v632
        %937 = vst [vmem:[%s142 + $0x570] sm:$0xff] %v633
        %938 = vst [vmem:[%s142 + $0x578] sm:$0xff] %v634
        %939 = vst [vmem:[%s142 + $0x580] sm:$0xff] %v635
        %940 = vst [vmem:[%s142 + $0x588] sm:$0xff] %v636
        %941 = vst [vmem:[%s142 + $0x590] sm:$0xff] %v637
        %942 = vst [vmem:[%s142 + $0x598] sm:$0xff] %v638
        %943 = vst [vmem:[%s142 + $0x5a0] sm:$0xff] %v639
        %944 = vst [vmem:[%s142 + $0x5a8] sm:$0xff] %v640
        %945 = vst [vmem:[%s142 + $0x5b0] sm:$0xff] %v641
        %946 = vst [vmem:[%s142 + $0x5b8] sm:$0xff] %v642
        %947 = vst [vmem:[%s142 + $0x5c0] sm:$0xff] %v643
        %948 = vst [vmem:[%s142 + $0x5c8] sm:$0xff] %v644
        %949 = vst [vmem:[%s142 + $0x5d0] sm:$0xff] %v645
        %950 = vst [vmem:[%s142 + $0x5d8] sm:$0xff] %v646
        %951 = vst [vmem:[%s142 + $0x5e0] sm:$0xff] %v647
        %952 = vst [vmem:[%s142 + $0x5e8] sm:$0xff] %v648
        %953 = vst [vmem:[%s142 + $0x5f0] sm:$0xff] %v649
        %954 = vst [vmem:[%s142 + $0x5f8] sm:$0xff] %v650
        %955 = vst [vmem:[%s142 + $0x600] sm:$0xff] %v651
        %956 = vst [vmem:[%s142 + $0x608] sm:$0xff] %v652
        %957 = vst [vmem:[%s142 + $0x610] sm:$0xff] %v653
        %958 = vst [vmem:[%s142 + $0x618] sm:$0xff] %v654
        %959 = vst [vmem:[%s142 + $0x620] sm:$0xff] %v655
        %960 = vst [vmem:[%s142 + $0x628] sm:$0xff] %v656
        %961 = vst [vmem:[%s142 + $0x630] sm:$0xff] %v657
        %962 = vst [vmem:[%s142 + $0x638] sm:$0xff] %v658
        %963 = vst [vmem:[%s142 + $0x640] sm:$0xff] %v659
        %964 = vst [vmem:[%s142 + $0x648] sm:$0xff] %v660
        %965 = vst [vmem:[%s142 + $0x650] sm:$0xff] %v661
        %966 = vst [vmem:[%s142 + $0x658] sm:$0xff] %v662
        %967 = vst [vmem:[%s142 + $0x660] sm:$0xff] %v663
        %968 = vst [vmem:[%s142 + $0x668] sm:$0xff] %v664
        %969 = vst [vmem:[%s142 + $0x670] sm:$0xff] %v665
        %970 = vst [vmem:[%s142 + $0x678] sm:$0xff] %v666
        %971 = vst [vmem:[%s142 + $0x680] sm:$0xff] %v667
        %972 = vst [vmem:[%s142 + $0x688] sm:$0xff] %v668
        %973 = vst [vmem:[%s142 + $0x690] sm:$0xff] %v669
        %974 = vst [vmem:[%s142 + $0x698] sm:$0xff] %v670
        %975 = vst [vmem:[%s142 + $0x6a0] sm:$0xff] %v671
        %976 = vst [vmem:[%s142 + $0x6a8] sm:$0xff] %v672
        %977 = vst [vmem:[%s142 + $0x6b0] sm:$0xff] %v673
        %978 = vst [vmem:[%s142 + $0x6b8] sm:$0xff] %v674
        %979 = vst [vmem:[%s142 + $0x6c0] sm:$0xff] %v675
        %980 = vst [vmem:[%s142 + $0x6c8] sm:$0xff] %v676
        %981 = vst [vmem:[%s142 + $0x6d0] sm:$0xff] %v677
        %982 = vst [vmem:[%s142 + $0x6d8] sm:$0xff] %v678
        %983 = vst [vmem:[%s142 + $0x6e0] sm:$0xff] %v679
        %984 = vst [vmem:[%s142 + $0x6e8] sm:$0xff] %v680
        %985 = vst [vmem:[%s142 + $0x6f0] sm:$0xff] %v681
        %986 = vst [vmem:[%s142 + $0x6f8] sm:$0xff] %v682
        %987 = vst [vmem:[%s142 + $0x700] sm:$0xff] %v683
        %988 = vst [vmem:[%s142 + $0x708] sm:$0xff] %v684
        %989 = vst [vmem:[%s142 + $0x710] sm:$0xff] %v685
        %990 = vst [vmem:[%s142 + $0x718] sm:$0xff] %v686
        %991 = vst [vmem:[%s142 + $0x720] sm:$0xff] %v687
        %992 = vst [vmem:[%s142 + $0x728] sm:$0xff] %v688
        %993 = vst [vmem:[%s142 + $0x730] sm:$0xff] %v689
        %994 = vst [vmem:[%s142 + $0x738] sm:$0xff] %v690
        %995 = vst [vmem:[%s142 + $0x740] sm:$0xff] %v691
        %996 = vst [vmem:[%s142 + $0x748] sm:$0xff] %v692
        %997 = vst [vmem:[%s142 + $0x750] sm:$0xff] %v693
        %998 = vst [vmem:[%s142 + $0x758] sm:$0xff] %v694
        %999 = vst [vmem:[%s142 + $0x760] sm:$0xff] %v695
        %1000 = vst [vmem:[%s142 + $0x768] sm:$0xff] %v696
        %1001 = vst [vmem:[%s142 + $0x770] sm:$0xff] %v697
        %1002 = vst [vmem:[%s142 + $0x778] sm:$0xff] %v698
        %1003 = vst [vmem:[%s142 + $0x780] sm:$0xff] %v699
        %1004 = vst [vmem:[%s142 + $0x788] sm:$0xff] %v700
        %1005 = vst [vmem:[%s142 + $0x790] sm:$0xff] %v701
        %1006 = vst [vmem:[%s142 + $0x798] sm:$0xff] %v702
        %1007 = vst [vmem:[%s142 + $0x7a0] sm:$0xff] %v703
        %1008 = vst [vmem:[%s142 + $0x7a8] sm:$0xff] %v704
        %1009 = vst [vmem:[%s142 + $0x7b0] sm:$0xff] %v705
        %1010 = vst [vmem:[%s142 + $0x7b8] sm:$0xff] %v706
        %1011 = vst [vmem:[%s142 + $0x7c0] sm:$0xff] %v707
        %1012 = vst [vmem:[%s142 + $0x7c8] sm:$0xff] %v708
        %1013 = vst [vmem:[%s142 + $0x7d0] sm:$0xff] %v709
        %1014 = vst [vmem:[%s142 + $0x7d8] sm:$0xff] %v710
        %1015 = vst [vmem:[%s142 + $0x7e0] sm:$0xff] %v711
        %1016 = vst [vmem:[%s142 + $0x7e8] sm:$0xff] %v712
        %1017 = vst [vmem:[%s142 + $0x7f0] sm:$0xff] %v713
        %1018 = vst [vmem:[%s142 + $0x7f8] sm:$0xff] %v714
        %1019 = vst [vmem:[%s142 + $0x800] sm:$0xff] %v715
        %1020 = vst [vmem:[%s142 + $0x808] sm:$0xff] %v716
        %1021 = vst [vmem:[%s142 + $0x810] sm:$0xff] %v717
        %1022 = vst [vmem:[%s142 + $0x818] sm:$0xff] %v718
        %1023 = vst [vmem:[%s142 + $0x820] sm:$0xff] %v719
        %1024 = vst [vmem:[%s142 + $0x828] sm:$0xff] %v720
        %1025 = vst [vmem:[%s142 + $0x830] sm:$0xff] %v721
        %1026 = vst [vmem:[%s142 + $0x838] sm:$0xff] %v722
        %1027 = vst [vmem:[%s142 + $0x840] sm:$0xff] %v723
        %1028 = vst [vmem:[%s142 + $0x848] sm:$0xff] %v724
        %1029 = vst [vmem:[%s142 + $0x850] sm:$0xff] %v725
        %1030 = vst [vmem:[%s142 + $0x858] sm:$0xff] %v726
        %1031 = vst [vmem:[%s142 + $0x860] sm:$0xff] %v727
        %1032 = vst [vmem:[%s142 + $0x868] sm:$0xff] %v728
        %1033 = vst [vmem:[%s142 + $0x870] sm:$0xff] %v729
        %1034 = vst [vmem:[%s142 + $0x878] sm:$0xff] %v730
        %1035 = vst [vmem:[%s142 + $0x880] sm:$0xff] %v731
        %1036 = vst [vmem:[%s142 + $0x888] sm:$0xff] %v732
        %1037 = vst [vmem:[%s142 + $0x890] sm:$0xff] %v733
        %1038 = vst [vmem:[%s142 + $0x898] sm:$0xff] %v734
        %1039 = vst [vmem:[%s142 + $0x8a0] sm:$0xff] %v735
        %1040 = vst [vmem:[%s142 + $0x8a8] sm:$0xff] %v736
        %1041 = vst [vmem:[%s142 + $0x8b0] sm:$0xff] %v737
        %1042 = vst [vmem:[%s142 + $0x8b8] sm:$0xff] %v738
        %1043 = vst [vmem:[%s142 + $0x8c0] sm:$0xff] %v739
        %1044 = vst [vmem:[%s142 + $0x8c8] sm:$0xff] %v740
        %1045 = vst [vmem:[%s142 + $0x8d0] sm:$0xff] %v741
        %1046 = vst [vmem:[%s142 + $0x8d8] sm:$0xff] %v742
        %1047 = vst [vmem:[%s142 + $0x8e0] sm:$0xff] %v743
        %1048 = vst [vmem:[%s142 + $0x8e8] sm:$0xff] %v744
        %1049 = vst [vmem:[%s142 + $0x8f0] sm:$0xff] %v745
        %1050 = vst [vmem:[%s142 + $0x8f8] sm:$0xff] %v746
        %1051 = vst [vmem:[%s142 + $0x900] sm:$0xff] %v747
        %1052 = vst [vmem:[%s142 + $0x908] sm:$0xff] %v748
        %1053 = vst [vmem:[%s142 + $0x910] sm:$0xff] %v749
        %1054 = vst [vmem:[%s142 + $0x918] sm:$0xff] %v750
        %1055 = vst [vmem:[%s142 + $0x920] sm:$0xff] %v751
        %1056 = vst [vmem:[%s142 + $0x928] sm:$0xff] %v752
        %1057 = vst [vmem:[%s142 + $0x930] sm:$0xff] %v753
        %1058 = vst [vmem:[%s142 + $0x938] sm:$0xff] %v754
        %1059 = vst [vmem:[%s142 + $0x940] sm:$0xff] %v755
        %1060 = vst [vmem:[%s142 + $0x948] sm:$0xff] %v756
        %1061 = vst [vmem:[%s142 + $0x950] sm:$0xff] %v757
        %1062 = vst [vmem:[%s142 + $0x958] sm:$0xff] %v758
        %1063 = vst [vmem:[%s142 + $0x960] sm:$0xff] %v759
        %1064 = vst [vmem:[%s142 + $0x968] sm:$0xff] %v760
        %1065 = vst [vmem:[%s142 + $0x970] sm:$0xff] %v761
        %1066 = vst [vmem:[%s142 + $0x978] sm:$0xff] %v762
        %s1067 = sand.u32 %s52, 1
        %s1068 = scalar_lea.sflag [#allocation4], %s1067
        %s1069 = sand.u32 %s52, 1
        %s1070 = smul.addr %s1069, 2432
        %s1071 = scalar_lea.vmem [#allocation5], %s1070
        // Predicated region
        $region29: #{tpu_custom_call.1} parent=23 // pred_check
          %p1072 = pneg %p62
        $region30: #{tpu_custom_call.1} parent=23 // pred_check_branch
          %1074 = sbr.rel (%p1072) target = $region32
        $region31: #{tpu_custom_call.1} parent=23 // pred_region
          %s1075 = smul.u32 38, %s18
          %s1076 = ssub.s32 75, %s1075
          %p1077 = scmp.lt.s32.totalorder %s1076, 38
          %s1078 = scalar_select %p1077, %s1076, 38
          %s1079 = smul.u32 128, %s1078
          %s1080 = smul.u32 %s1079, 8
          %s1082 = ssub.s32 38912, %s1080
          %1083 = vsyncadd %s1068, %s1082
          %p1084 = scmp.ne.s32.totalorder 0, %s1080
          %s1085 = smul.addr %s1075, 8
          %s1086 = smul.addr %s1085, 128
          %s1087 = scalar_lea.hbm %s1, %s1086
          %s1088 = smul.u32 64, %s1078
          %s1089 = sshll.u32 %s1071, 4
          %s1090 = int_to_ptr.vmem [resolvable:$true] %s1089
          %s1091 = sshll.u32 %s1088, 4
          %1095 = dma.vmem_to_hbm [thread:$0]  (%p1084), %s1090, %s1091, %s1087, %s1068, 1024, 1024, 64
        $region32: #{tpu_custom_call.1} parent=23 // pred_fallthru
          _
      $region24: #{tpu_custom_call.1} parent=5 // pred_fallthru
        _
      %p1096 = scmp.le.s32.totalorder 2, %s13
      // Predicated region
      $region33: #{tpu_custom_call.1} parent=5 // pred_check
        %p1097 = pneg %p1096
      $region34: #{tpu_custom_call.1} parent=5 // pred_check_branch
        %1099 = sbr.rel (%p1097) target = $region36
      $region35: #{tpu_custom_call.1} parent=5 // pred_region
        %s1100 = ssub.s32 %s13, 2
        // Predicated region
        $region37: #{tpu_custom_call.1} parent=35 // pred_check
          %p1101 = pneg %p68
        $region38: #{tpu_custom_call.1} parent=35 // pred_check_branch
          %1103 = sbr.rel (%p1101) target = $region40
        $region39: #{tpu_custom_call.1} parent=35 // pred_region
          %s1104 = sand.u32 %s53, 1
          %s1105 = scalar_lea.sflag [#allocation4], %s1104
          %s1106 = sand.u32 %s53, 1
          %s1107 = smul.addr %s1106, 2432
          %s1108 = scalar_lea.vmem [#allocation5], %s1107
          %1109 = dma.done %s1105, 38912
        $region40: #{tpu_custom_call.1} parent=35 // pred_fallthru
          _
      $region36: #{tpu_custom_call.1} parent=5 // pred_fallthru
        _
    $region6: #{tpu_custom_call.1} parent=1 // loop_footer
      %s17 = sadd.s32 1, %s13
    $region7: #{tpu_custom_call.1} parent=1 // loop_footer_branch
      %12 = sbr.rel target = $region3
    $region8: #{tpu_custom_call.1} parent=1 // loop_exit
      _
    %1110 = vsyncpa [#allocation3], 1
    %s1111 = scalar_lea.sflag [#allocation3], 1
    %1112 = vsyncpa %s1111, 1
    %1113 = vsyncpa [#allocation4], 1
    %s1114 = scalar_lea.sflag [#allocation4], 1
    %1115 = vsyncpa %s1114, 1

</llo_original>
